<compile_context>
chip_gen: v5e
topology: v5e:2x2
jax: 0.10.0
libtpu: 0.0.40
codegen_flags: <defaults>
</compile_context>

<pallas_src>
import functools

import jax
import jax.numpy as jnp
from jax.experimental import pallas as pl
from jax.experimental.pallas import tpu as pltpu


def _round_up(x, m):
    return ((x + m - 1) // m) * m


def _pick_batch_tile(batch, row_bytes, *, target_block_bytes=4 << 20, cap=2048):
    """Batch tile: ~target_block_bytes per h block, multiple of 8, never larger
    than the padded batch, and >=2 (ideally >=4) grid steps so DMA
    double-buffering and v7x megacore sharding can engage."""
    tb = max(8, min(cap, target_block_bytes // max(row_bytes, 1)))
    tb -= tb % 8
    tb = max(tb, 8)
    tb = min(tb, _round_up(batch, 8))
    if batch > 32:
        tb = min(tb, max(8, _round_up(-(-batch // 4), 8)))   # >= ~4 tiles
    elif batch > 8:
        tb = min(tb, max(8, _round_up(-(-batch // 2), 8)))   # >= 2 tiles
    return max(tb, 8)


def _proj_stats_kernel(h_ref, w1_ref, z_ref, psum_ref, psumsq_ref):
    """Pass 1: z = h @ w1 for this batch tile + per-tile partial sum / sumsq.

    No revisited accumulator: every output block belongs to this grid step
    only, so the grid axis is fully parallel (megacore-friendly)."""
    z = jnp.dot(h_ref[...], w1_ref[...], preferred_element_type=jnp.float32)
    z_ref[...] = z
    s = jnp.sum(z, axis=0, keepdims=True)          # (1, 2D)
    sq = jnp.sum(z * z, axis=0, keepdims=True)     # (1, 2D)
    # Partial-stat blocks are (1, 8, 2D) to keep the last-two dims (8, 2D)
    # tiling-friendly; broadcast the row across the 8 sublanes.
    psum_ref[...] = jnp.broadcast_to(s[None], psum_ref.shape)
    psumsq_ref[...] = jnp.broadcast_to(sq[None], psumsq_ref.shape)


def _apply_kernel(h_ref, z_ref, scale_ref, shift_ref, w2_ref, b2_ref, out_ref,
                  *, num_views, latent_dim, inv_tau):
    """Pass 2: folded BN -> ReLU -> Linear -> sigmoid/tau -> softmax -> fuse."""
    # BatchNorm folded to a single FMA (b1 cancelled exactly), then ReLU.
    a = jnp.maximum(z_ref[...] * scale_ref[...] + shift_ref[...], 0.0)

    act = jnp.dot(a, w2_ref[...], preferred_element_type=jnp.float32) + b2_ref[...]
    act = jax.nn.sigmoid(act) * inv_tau            # bounded in (0, inv_tau]
    ex = jnp.exp(act)                              # safe: no max-subtraction needed
    e = ex / jnp.sum(ex, axis=1, keepdims=True)    # exact reciprocal; denom is (tb, 1)

    d = latent_dim
    # Read the per-view lane slices of the concat block inside the loop (short
    # live ranges; vld slots make the re-reads essentially free).
    fused = e[:, 0:1] * h_ref[:, 0:d]
    for v in range(1, num_views):
        fused = fused + e[:, v:v + 1] * h_ref[:, v * d:(v + 1) * d]
    out_ref[...] = fused.astype(out_ref.dtype)


def attention_layer_list(h_list, params, *, tau=10.0, batch_tile=None):
    """h_list: list of [B, D] arrays (same shape). Returns fused_h [B, D]."""
    num_views = len(h_list)
    B, D = h_list[0].shape
    d_in, d_hid = num_views * D, 2 * D
    out_dtype = h_list[0].dtype

    h = jnp.concatenate(h_list, axis=1)            # [B, V*D] (matches PyTorch cat)
    w1 = params["w1"]                              # [V*D, 2D]
    w2 = params["w2"]                              # [2D, V]
    b2 = params["b2"].reshape(1, num_views)
    gamma = params["gamma"].reshape(1, d_hid)
    beta = params["beta"].reshape(1, d_hid)
    # NOTE: params["b1"] is intentionally unused — a per-feature constant bias
    # cancels exactly under training-mode (batch-statistic) BatchNorm.

    row_bytes = d_in * h.dtype.itemsize + d_hid * 4
    tb = batch_tile if batch_tile is not None else _pick_batch_tile(B, row_bytes)
    b_pad = _round_up(B, tb)
    if b_pad != B:
        # Zero rows contribute 0 to sum/sumsq (no b1) and are sliced off below.
        h = jnp.pad(h, ((0, b_pad - B), (0, 0)))
    num_tiles = b_pad // tb

    vmem_limit = 48 * 1024 * 1024   # > v5e 16 MiB scoped default, < v7x 64 MiB VMEM
    # TODO(synk): for very large D, w1 [V*D, 2D] should additionally be K-tiled
    # (and/or single-buffered) to stay inside v7x's 64 MiB VMEM.

    # ---- pass 1: z = h @ w1 + per-tile partial batch statistics ------------
    ce1 = pl.CostEstimate(
        flops=2 * b_pad * d_in * d_hid + 4 * b_pad * d_hid,
        transcendentals=0,
        bytes_accessed=(h.dtype.itemsize * b_pad * d_in
                        + 4 * (d_in * d_hid + b_pad * d_hid + 16 * num_tiles * d_hid)))
    z, psum, psumsq = pl.pallas_call(
        _proj_stats_kernel,
        out_shape=(jax.ShapeDtypeStruct((b_pad, d_hid), jnp.float32),
                   jax.ShapeDtypeStruct((num_tiles, 8, d_hid), jnp.float32),
                   jax.ShapeDtypeStruct((num_tiles, 8, d_hid), jnp.float32)),
        grid=(num_tiles,),
        in_specs=[pl.BlockSpec((tb, d_in), lambda i: (i, 0)),
                  pl.BlockSpec((d_in, d_hid), lambda i: (0, 0))],
        out_specs=(pl.BlockSpec((tb, d_hid), lambda i: (i, 0)),
                   pl.BlockSpec((1, 8, d_hid), lambda i: (i, 0, 0)),
                   pl.BlockSpec((1, 8, d_hid), lambda i: (i, 0, 0))),
        compiler_params=pltpu.CompilerParams(
            dimension_semantics=("parallel",),
            vmem_limit_bytes=vmem_limit),
        cost_estimate=ce1,
    )(h, w1)

    # ---- tiny [2D] fold in the wrapper: (mean, var) -> (scale, shift) ------
    zsum = jnp.sum(psum[:, 0, :], axis=0, keepdims=True)      # (1, 2D)
    zsumsq = jnp.sum(psumsq[:, 0, :], axis=0, keepdims=True)  # (1, 2D)
    mean = zsum / B                                   # true B (padding-safe)
    # Biased variance (BN training). E[z^2]-E[z]^2 in f32; clamp tiny negatives.
    var = jnp.maximum(zsumsq / B - mean * mean, 0.0)
    scale = gamma * jax.lax.rsqrt(var + 1e-5)
    shift = beta - mean * scale

    # ---- pass 2: folded BN + attention fusion, fully parallel over tiles ----
    ce2 = pl.CostEstimate(
        flops=(2 * b_pad * d_hid * num_views + 6 * b_pad * d_hid
               + 3 * b_pad * num_views * D),
        transcendentals=3 * b_pad * num_views,
        bytes_accessed=(h.dtype.itemsize * b_pad * (d_in + D)
                        + 4 * (b_pad * d_hid + d_hid * num_views + 2 * d_hid + num_views)))
    out = pl.pallas_call(
        functools.partial(_apply_kernel, num_views=num_views, latent_dim=D,
                          inv_tau=1.0 / tau),
        out_shape=jax.ShapeDtypeStruct((b_pad, D), out_dtype),
        grid=(num_tiles,),
        in_specs=[pl.BlockSpec((tb, d_in), lambda i: (i, 0)),
                  pl.BlockSpec((tb, d_hid), lambda i: (i, 0)),
                  pl.BlockSpec((1, d_hid), lambda i: (0, 0)),
                  pl.BlockSpec((1, d_hid), lambda i: (0, 0)),
                  pl.BlockSpec((d_hid, num_views), lambda i: (0, 0)),
                  pl.BlockSpec((1, num_views), lambda i: (0, 0))],
        out_specs=pl.BlockSpec((tb, D), lambda i: (i, 0)),
        compiler_params=pltpu.CompilerParams(
            dimension_semantics=("parallel",),
            vmem_limit_bytes=vmem_limit),
        cost_estimate=ce2,
    )(h, z, scale, shift, w2, b2)

    return out[:B] if b_pad != B else out


def _reference(h_list, params, tau=10.0):
    """Pure-JAX reference mirroring the PyTorch forward (training-mode BN)."""
    h = jnp.concatenate(h_list, axis=1)
    z = h @ params["w1"] + params["b1"]
    mean = jnp.mean(z, axis=0, keepdims=True)
    var = jnp.mean((z - mean) ** 2, axis=0, keepdims=True)
    z = (z - mean) / jnp.sqrt(var + 1e-5) * params["gamma"] + params["beta"]
    a = jnp.maximum(z, 0.0)
    act = a @ params["w2"] + params["b2"]
    act = jax.nn.sigmoid(act) / tau
    e = jax.nn.softmax(act, axis=1)
    hs = jnp.stack(h_list, axis=1)                 # [B, V, D]
    return jnp.sum(e[:, :, None] * hs, axis=1)


def init_params(key, latent_dim, num_views):
    d_in = latent_dim * num_views
    d_hid = latent_dim * 2
    k1, k2, k3, k4, k5, k6 = jax.random.split(key, 6)
    lim1 = 1.0 / jnp.sqrt(d_in)
    lim2 = 1.0 / jnp.sqrt(d_hid)
    return {
        "w1": jax.random.uniform(k1, (d_in, d_hid), jnp.float32, -lim1, lim1),
        "b1": jax.random.uniform(k2, (d_hid,), jnp.float32, -lim1, lim1),
        # non-default gamma/beta so the BN affine path is actually exercised
        "gamma": jax.random.uniform(k5, (d_hid,), jnp.float32, 0.5, 1.5),
        "beta": 0.1 * jax.random.normal(k6, (d_hid,), jnp.float32),
        "w2": jax.random.uniform(k3, (d_hid, num_views), jnp.float32, -lim2, lim2),
        "b2": jax.random.uniform(k4, (num_views,), jnp.float32, -lim2, lim2),
    }


if __name__ == "__main__":
    B, D, V = 64, 32, 4          # batch, latent_dim, num_views
    key = jax.random.PRNGKey(0)
    kp, *kh = jax.random.split(key, V + 1)

    params = init_params(kp, D, V)
    h_list = [jax.random.normal(k, (B, D), jnp.float32) for k in kh]

    # auto tile -> tb=16, 4 grid steps: exercises pipelining + two-pass BN path
    fused = attention_layer_list(h_list, params, tau=10.0)
    fused = jax.block_until_ready(fused)

    ref = _reference(h_list, params, tau=10.0)
    assert fused.shape == (B, D)
    max_err = float(jnp.max(jnp.abs(fused - ref)))
    assert jnp.allclose(fused, ref, atol=2e-3, rtol=2e-3), (
        f"mismatch vs reference (max abs err {max_err:.3e})")

    print("KERNEL_OK")
</pallas_src>

<mosaic_0001>
module attributes {stable_mosaic.version = 11 : i64} {
  func.func @_proj_stats_kernel(%arg0: i32, %arg1: memref<16x128xf32, #tpu.memory_space<vmem>>, %arg2: memref<128x64xf32, #tpu.memory_space<vmem>>, %arg3: memref<16x64xf32, #tpu.memory_space<vmem>>, %arg4: memref<1x8x64xf32, #tpu.memory_space<vmem>>, %arg5: memref<1x8x64xf32, #tpu.memory_space<vmem>>) attributes {dimension_semantics = [#tpu.dimension_semantics<parallel>], iteration_bounds = array<i64: 4>, scalar_prefetch = 0 : i64, scratch_operands = 0 : i64, tpu.core_type = #tpu.core_type<tc>, window_params = [{transform_indices = @transform_0, window_bounds = array<i64: 16, 128>}, {pipeline_mode = #tpu.pipeline_mode<synchronous>, transform_indices = @transform_1, window_bounds = array<i64: 128, 64>}, {transform_indices = @transform_2, window_bounds = array<i64: 16, 64>}, {transform_indices = @transform_3, window_bounds = array<i64: 1, 8, 64>}, {transform_indices = @transform_4, window_bounds = array<i64: 1, 8, 64>}]} {
    %c0 = arith.constant 0 : index
    %c0_0 = arith.constant 0 : index
    %0 = vector.load %arg1[%c0, %c0_0] : memref<16x128xf32, #tpu.memory_space<vmem>>, vector<16x128xf32>
    %c0_1 = arith.constant 0 : index
    %c0_2 = arith.constant 0 : index
    %1 = vector.load %arg2[%c0_1, %c0_2] : memref<128x64xf32, #tpu.memory_space<vmem>>, vector<128x64xf32>
    %cst = arith.constant dense<0.000000e+00> : vector<16x64xf32>
    %2 = tpu.matmul %0, %1, %cst {dimension_numbers = #tpu.dot_dimension_numbers<[1], [0], [0], [1], [0, 0, 1, 1], [], []>} : vector<16x128xf32>, vector<128x64xf32>, vector<16x64xf32> -> vector<16x64xf32>
    %c0_3 = arith.constant 0 : index
    %c0_4 = arith.constant 0 : index
    %3 = vector.load %arg3[%c0_3, %c0_4] : memref<16x64xf32, #tpu.memory_space<vmem>>, vector<16x64xf32>
    tpu.vector_store %arg3[%c0_3, %c0_4], %2 {strides = array<i32>} : memref<16x64xf32, #tpu.memory_space<vmem>>, vector<16x64xf32>,
    %cst_5 = arith.constant dense<0.000000e+00> : vector<64xf32>
    %4 = vector.multi_reduction <add>, %2, %cst_5 [0] : vector<16x64xf32> to vector<64xf32>
    %5 = vector.shape_cast %4 : vector<64xf32> to vector<1x64xf32>
    %6 = arith.mulf %2, %2 : vector<16x64xf32>
    %cst_6 = arith.constant dense<0.000000e+00> : vector<64xf32>
    %7 = vector.multi_reduction <add>, %6, %cst_6 [0] : vector<16x64xf32> to vector<64xf32>
    %8 = vector.shape_cast %7 : vector<64xf32> to vector<1x64xf32>
    %9 = vector.shape_cast %5 : vector<1x64xf32> to vector<1x1x64xf32>
    %10 = vector.shape_cast %9 : vector<1x1x64xf32> to vector<1x1x64xf32>
    %11 = vector.broadcast %10 : vector<1x1x64xf32> to vector<1x8x64xf32>
    %c0_7 = arith.constant 0 : index
    %c0_8 = arith.constant 0 : index
    %c0_9 = arith.constant 0 : index
    %12 = vector.load %arg4[%c0_7, %c0_8, %c0_9] : memref<1x8x64xf32, #tpu.memory_space<vmem>>, vector<1x8x64xf32>
    tpu.vector_store %arg4[%c0_7, %c0_8, %c0_9], %11 {strides = array<i32>} : memref<1x8x64xf32, #tpu.memory_space<vmem>>, vector<1x8x64xf32>,
    %13 = vector.shape_cast %8 : vector<1x64xf32> to vector<1x1x64xf32>
    %14 = vector.shape_cast %13 : vector<1x1x64xf32> to vector<1x1x64xf32>
    %15 = vector.broadcast %14 : vector<1x1x64xf32> to vector<1x8x64xf32>
    %c0_10 = arith.constant 0 : index
    %c0_11 = arith.constant 0 : index
    %c0_12 = arith.constant 0 : index
    %16 = vector.load %arg5[%c0_10, %c0_11, %c0_12] : memref<1x8x64xf32, #tpu.memory_space<vmem>>, vector<1x8x64xf32>
    tpu.vector_store %arg5[%c0_10, %c0_11, %c0_12], %15 {strides = array<i32>} : memref<1x8x64xf32, #tpu.memory_space<vmem>>, vector<1x8x64xf32>,
    return
  }
  func.func @transform_0(%arg0: i32) -> (i32, i32) {
    %c0_i32 = arith.constant 0 : i32
    %c0_i32_0 = arith.constant 0 : i32
    return %arg0, %c0_i32 : i32, i32
  }
  func.func @transform_1(%arg0: i32) -> (i32, i32) {
    %c0_i32 = arith.constant 0 : i32
    %c0_i32_0 = arith.constant 0 : i32
    %c0_i32_1 = arith.constant 0 : i32
    return %c0_i32, %c0_i32_0 : i32, i32
  }
  func.func @transform_2(%arg0: i32) -> (i32, i32) {
    %c0_i32 = arith.constant 0 : i32
    %c0_i32_0 = arith.constant 0 : i32
    return %arg0, %c0_i32 : i32, i32
  }
  func.func @transform_3(%arg0: i32) -> (i32, i32, i32) {
    %c0_i32 = arith.constant 0 : i32
    %c0_i32_0 = arith.constant 0 : i32
    %c0_i32_1 = arith.constant 0 : i32
    return %arg0, %c0_i32, %c0_i32_0 : i32, i32, i32
  }
  func.func @transform_4(%arg0: i32) -> (i32, i32, i32) {
    %c0_i32 = arith.constant 0 : i32
    %c0_i32_0 = arith.constant 0 : i32
    %c0_i32_1 = arith.constant 0 : i32
    return %arg0, %c0_i32, %c0_i32_0 : i32, i32, i32
  }
}

</mosaic_0001>

<llo_original>
// kernel: tpu_custom_call.1
$region0: #{tpu_custom_call.1}
  #allocation0 [shape = 'u32[]', space=smem, size = 0x4, offset = 0x4, fixed_abs, tag = 'smem constant byte address 0x4 - core index']
  #allocation1 [shape = 'u32[72,128]{1,0:T(1,128)}', space=vmem, size = 0x9000, scoped, tag = 'internal scratch']
  %s0 = inlined_call_operand.vmem [shape: f32[64,128], index: 0, kind: input, shape index: {}]
  %s1 = inlined_call_operand.vmem [shape: f32[128,64], index: 1, kind: input, shape index: {}]
  %s2 = inlined_call_operand.hbm [shape: f32[64,64], index: 2, kind: output, shape index: {0}]
  %s3 = inlined_call_operand.hbm [shape: f32[4,8,64], index: 3, kind: output, shape index: {1}]
  %s4 = inlined_call_operand.hbm [shape: f32[4,8,64], index: 4, kind: output, shape index: {2}]
  %5 = xla_tuple %s2, %s3, %s4
  %s6 = sld [smem:[#allocation0]]
  $region57: #{tpu_custom_call.1} parent=0
    _
  %s8 = ssub.s32 1, %s6
  %s9 = scalar_select 0, %s8, %s6
  $region1: #{tpu_custom_call.1} parent=0
    #allocation2 [shape = 'u8[16384]{0}', space=vmem, size = 0x4000, scoped, tag = 'output window, operand 0']
    #allocation3 [shape = 's32[2]{0}', space=sflag, size = 0x8, scoped, tag = 'scoped memory for tpu_custom_call.1']
    #allocation4 [shape = 'u8[8192]{0}', space=vmem, size = 0x2000, scoped, tag = 'output window, operand 1']
    #allocation5 [shape = 's32[2]{0}', space=sflag, size = 0x8, scoped, tag = 'scoped memory for tpu_custom_call.1']
    #allocation6 [shape = 'u8[8192]{0}', space=vmem, size = 0x2000, scoped, tag = 'output window, operand 2']
    %10 = vsyncpa [#allocation3], 0
    %s11 = scalar_lea.sflag [#allocation3], 1
    %12 = vsyncpa %s11, 0
    %13 = vsyncpa [#allocation5], 0
    %s14 = scalar_lea.sflag [#allocation5], 1
    %15 = vsyncpa %s14, 0
    loop: start=0, step=1, limit=6
    $region2: #{tpu_custom_call.1} parent=1 // loop_pre_header
      _
    $region3: #{tpu_custom_call.1} parent=1 // loop_header
      %s17 = sphi 0, %s21
      %p18 = scmp.ge.s32.totalorder %s17, 6
      %s27 = sphi 0, %s29
      %s30 = sphi 0, %s27
      %s31 = sphi 0, %s30
      %s47 = sphi 0, %s31
      %s51 = sphi 0, %s51
      %s53 = sphi 0, %s51
      %s54 = sphi 0, %s53
      %s68 = sphi 0, %s54
      %s74 = sphi 0, %s76
      %s77 = sphi 0, %s74
      %s78 = sphi 0, %s77
      %s94 = sphi 0, %s78
      %s100 = sphi 0, %s102
      %s103 = sphi 0, %s100
      %s104 = sphi 0, %s103
      %s120 = sphi 0, %s104
      %s126 = sphi 0, %s128
      %s129 = sphi 0, %s126
      %s130 = sphi 0, %s129
      %s146 = sphi 0, %s130
    $region4: #{tpu_custom_call.1} parent=1 // loop_header_branch
      %20 = sbr.rel (%p18) target = $region8
    $region5: #{tpu_custom_call.1} parent=1 // loop_body
      %s22 = ssub.s32 %s17, 1
      %s23 = ssub.s32 %s17, 2
      %s24 = sadd.s32 %s17, 1
      %s25 = ssub.s32 %s17, %s24
      %p26 = scmp.eq.s32.totalorder %s25, 0
      %s28 = sadd.s32 %s27, 1
      %s29 = scalar_select %p26, %s27, %s28
      %p32 = pneg %p26
      %p33 = scmp.eq.s32.totalorder %s17, 3
      %p34 = por %p32, %p33
      %p35 = scmp.ne.s32.totalorder %s27, %s30
      %p36 = scmp.eq.s32.totalorder %s17, 0
      %p37 = por %p35, %p36
      %p38 = scmp.ne.s32.totalorder %s27, %s30
      %p39 = scmp.eq.s32.totalorder %s22, 3
      %p40 = por %p38, %p39
      %p41 = scmp.ne.s32.totalorder %s30, %s31
      %p42 = scmp.eq.s32.totalorder %s22, 0
      %p43 = por %p41, %p42
      %p44 = scmp.ne.s32.totalorder %s30, %s31
      %p45 = scmp.eq.s32.totalorder %s23, 3
      %p46 = por %p44, %p45
      %p48 = scmp.ne.s32.totalorder %s31, %s47
      %p49 = scmp.eq.s32.totalorder %s23, 0
      %p50 = por %p48, %p49
      %s52 = sadd.s32 %s51, 1
      %p55 = scmp.eq.s32.totalorder %s17, 3
      %p56 = scmp.ne.s32.totalorder %s51, %s53
      %p57 = scmp.eq.s32.totalorder %s17, 0
      %p58 = por %p56, %p57
      %p59 = scmp.ne.s32.totalorder %s51, %s53
      %p60 = scmp.eq.s32.totalorder %s22, 3
      %p61 = por %p59, %p60
      %p62 = scmp.ne.s32.totalorder %s53, %s54
      %p63 = scmp.eq.s32.totalorder %s22, 0
      %p64 = por %p62, %p63
      %p65 = scmp.ne.s32.totalorder %s53, %s54
      %p66 = scmp.eq.s32.totalorder %s23, 3
      %p67 = por %p65, %p66
      %p69 = scmp.ne.s32.totalorder %s54, %s68
      %p70 = scmp.eq.s32.totalorder %s23, 0
      %p71 = por %p69, %p70
      %s72 = ssub.s32 %s17, %s24
      %p73 = scmp.eq.s32.totalorder %s72, 0
      %s75 = sadd.s32 %s74, 1
      %s76 = scalar_select %p73, %s74, %s75
      %p79 = pneg %p73
      %p80 = scmp.eq.s32.totalorder %s17, 3
      %p81 = por %p79, %p80
      %p82 = scmp.ne.s32.totalorder %s74, %s77
      %p83 = scmp.eq.s32.totalorder %s17, 0
      %p84 = por %p82, %p83
      %p85 = scmp.ne.s32.totalorder %s74, %s77
      %p86 = scmp.eq.s32.totalorder %s22, 3
      %p87 = por %p85, %p86
      %p88 = scmp.ne.s32.totalorder %s77, %s78
      %p89 = scmp.eq.s32.totalorder %s22, 0
      %p90 = por %p88, %p89
      %p91 = scmp.ne.s32.totalorder %s77, %s78
      %p92 = scmp.eq.s32.totalorder %s23, 3
      %p93 = por %p91, %p92
      %p95 = scmp.ne.s32.totalorder %s78, %s94
      %p96 = scmp.eq.s32.totalorder %s23, 0
      %p97 = por %p95, %p96
      %s98 = ssub.s32 %s17, %s24
      %p99 = scmp.eq.s32.totalorder %s98, 0
      %s101 = sadd.s32 %s100, 1
      %s102 = scalar_select %p99, %s100, %s101
      %p105 = pneg %p99
      %p106 = scmp.eq.s32.totalorder %s17, 3
      %p107 = por %p105, %p106
      %p108 = scmp.ne.s32.totalorder %s100, %s103
      %p109 = scmp.eq.s32.totalorder %s17, 0
      %p110 = por %p108, %p109
      %p111 = scmp.ne.s32.totalorder %s100, %s103
      %p112 = scmp.eq.s32.totalorder %s22, 3
      %p113 = por %p111, %p112
      %p114 = scmp.ne.s32.totalorder %s103, %s104
      %p115 = scmp.eq.s32.totalorder %s22, 0
      %p116 = por %p114, %p115
      %p117 = scmp.ne.s32.totalorder %s103, %s104
      %p118 = scmp.eq.s32.totalorder %s23, 3
      %p119 = por %p117, %p118
      %p121 = scmp.ne.s32.totalorder %s104, %s120
      %p122 = scmp.eq.s32.totalorder %s23, 0
      %p123 = por %p121, %p122
      %s124 = ssub.s32 %s17, %s24
      %p125 = scmp.eq.s32.totalorder %s124, 0
      %s127 = sadd.s32 %s126, 1
      %s128 = scalar_select %p125, %s126, %s127
      %p131 = pneg %p125
      %p132 = scmp.eq.s32.totalorder %s17, 3
      %p133 = por %p131, %p132
      %p134 = scmp.ne.s32.totalorder %s126, %s129
      %p135 = scmp.eq.s32.totalorder %s17, 0
      %p136 = por %p134, %p135
      %p137 = scmp.ne.s32.totalorder %s126, %s129
      %p138 = scmp.eq.s32.totalorder %s22, 3
      %p139 = por %p137, %p138
      %p140 = scmp.ne.s32.totalorder %s129, %s130
      %p141 = scmp.eq.s32.totalorder %s22, 0
      %p142 = por %p140, %p141
      %p143 = scmp.ne.s32.totalorder %s129, %s130
      %p144 = scmp.eq.s32.totalorder %s23, 3
      %p145 = por %p143, %p144
      %p147 = scmp.ne.s32.totalorder %s130, %s146
      %p148 = scmp.eq.s32.totalorder %s23, 0
      %p149 = por %p147, %p148
      %p150 = scmp.le.s32.totalorder 1, %s17
      %p151 = scmp.lt.s32.totalorder %s17, 5
      %p152 = pnand %p150, %p151
      %p153 = pneg %p152
      // Predicated region
      $region9: #{tpu_custom_call.1} parent=5 // pred_check
        _
      $region10: #{tpu_custom_call.1} parent=5 // pred_check_branch
        %155 = sbr.rel (%p152) target = $region12
      $region11: #{tpu_custom_call.1} parent=5 // pred_region
        %s156 = ssub.s32 %s17, 1
        // Predicated region
        $region13: #{tpu_custom_call.1} parent=11 // pred_check
          %p157 = pneg %p64
        $region14: #{tpu_custom_call.1} parent=11 // pred_check_branch
          %159 = sbr.rel (%p157) target = $region16
        $region15: #{tpu_custom_call.1} parent=11 // pred_region
          _
        $region16: #{tpu_custom_call.1} parent=11 // pred_fallthru
          _
      $region12: #{tpu_custom_call.1} parent=5 // pred_fallthru
        _
      %p160 = scmp.lt.s32.totalorder %s17, 4
      // Predicated region
      $region17: #{tpu_custom_call.1} parent=5 // pred_check
        %p161 = pneg %p160
      $region18: #{tpu_custom_call.1} parent=5 // pred_check_branch
        %163 = sbr.rel (%p161) target = $region20
      $region19: #{tpu_custom_call.1} parent=5 // pred_region
        // Predicated region
        $region21: #{tpu_custom_call.1} parent=19 // pred_check
          %p164 = pneg %p37
        $region22: #{tpu_custom_call.1} parent=19 // pred_check_branch
          %166 = sbr.rel (%p164) target = $region24
        $region23: #{tpu_custom_call.1} parent=19 // pred_region
          %s167 = smul.u32 2, %s17
          %p168 = scmp.lt.s32.totalorder %s167, 7
          %s169 = scalar_select %p168, %s167, 7
          %s170 = smul.addr %s169, 8
          %s171 = scalar_lea.vmem %s0, %s170
          %s172 = smul.u32 2, %s17
        $region24: #{tpu_custom_call.1} parent=19 // pred_fallthru
          _
      $region20: #{tpu_custom_call.1} parent=5 // pred_fallthru
        _
      %p173 = scmp.le.s32.totalorder 1, %s17
      %p174 = scmp.lt.s32.totalorder %s17, 5
      %p175 = pnand %p173, %p174
      %p176 = pneg %p175
      // Predicated region
      $region25: #{tpu_custom_call.1} parent=5 // pred_check
        _
      $region26: #{tpu_custom_call.1} parent=5 // pred_check_branch
        %178 = sbr.rel (%p175) target = $region28
      $region27: #{tpu_custom_call.1} parent=5 // pred_region
        %s179 = ssub.s32 %s17, 1
        %s180 = smul.u32 2, %s22
        %p181 = scmp.lt.s32.totalorder %s180, 7
        %s182 = scalar_select %p181, %s180, 7
        %s183 = smul.addr %s182, 8
        %s184 = scalar_lea.vmem %s0, %s183
        %p185 = pneg %p43
        %p186 = pneg %p40
        %p187 = pneg %p64
        %p188 = pneg %p61
        %p189 = pneg %p90
        %p190 = pneg %p87
        %s191 = sand.u32 %s77, 1
        %s192 = scalar_lea.sflag [#allocation3], %s191
        %s193 = sand.u32 %s77, 1
        %s194 = smul.addr %s193, 16
        %s195 = scalar_lea.vmem [#allocation2], %s194
        %p196 = pneg %p116
        %p197 = pneg %p113
        %s198 = sand.u32 %s22, 1
        %s199 = scalar_lea.sflag [#allocation5], %s198
        %s200 = sand.u32 %s103, 1
        %s201 = smul.addr %s200, 8
        %s202 = scalar_lea.vmem [#allocation4], %s201
        %p203 = pneg %p142
        %p204 = pneg %p139
        %s205 = sand.u32 %s22, 1
        %s206 = scalar_lea.sflag [#allocation5], %s205
        %s207 = sand.u32 %s129, 1
        %s208 = smul.addr %s207, 8
        %s209 = scalar_lea.vmem [#allocation6], %s208
        %s210 = smul.u32 2, %s22
        %p211 = scmp.lt.s32.totalorder %s210, 7
        %s212 = scalar_select %p211, %s210, 7
        %s213 = smul.addr %s212, 8
        %s214 = scalar_lea.vmem %s0, %s213
        %s215 = smul.u32 2, %s22
        %s216 = smul.u32 2, %s22
        %v217 = vld [vmem:[%s214] sm:$0xff]
        %v218 = vld [vmem:[%s214 + $0x8] sm:$0xff]
        %v219 = vld [vmem:[%s1] sm:$0xff]
        %v220 = vld [vmem:[%s1 + $0x8] sm:$0xff]
        %v221 = vld [vmem:[%s1 + $0x10] sm:$0xff]
        %v222 = vld [vmem:[%s1 + $0x18] sm:$0xff]
        %v223 = vld [vmem:[%s1 + $0x20] sm:$0xff]
        %v224 = vld [vmem:[%s1 + $0x28] sm:$0xff]
        %v225 = vld [vmem:[%s1 + $0x30] sm:$0xff]
        %v226 = vld [vmem:[%s1 + $0x38] sm:$0xff]
        %v227 = vld [vmem:[%s1 + $0x40] sm:$0xff]
        %v228 = vld [vmem:[%s1 + $0x48] sm:$0xff]
        %v229 = vld [vmem:[%s1 + $0x50] sm:$0xff]
        %v230 = vld [vmem:[%s1 + $0x58] sm:$0xff]
        %v231 = vld [vmem:[%s1 + $0x60] sm:$0xff]
        %v232 = vld [vmem:[%s1 + $0x68] sm:$0xff]
        %v233 = vld [vmem:[%s1 + $0x70] sm:$0xff]
        %v234 = vld [vmem:[%s1 + $0x78] sm:$0xff]
        %235 = vmatpush.msra.mxu0 %v234
        %236 = vmatpush.msra.mxu0 %v233
        %237 = vmatpush.msra.mxu0 %v232
        %238 = vmatpush.msra.mxu0 %v231
        %239 = vmatpush.msra.mxu0 %v230
        %240 = vmatpush.msra.mxu0 %v229
        %241 = vmatpush.msra.mxu0 %v228
        %242 = vmatpush.msra.mxu0 %v227
        %243 = vmatpush.msra.mxu0 %v226
        %244 = vmatpush.msra.mxu0 %v225
        %245 = vmatpush.msra.mxu0 %v224
        %246 = vmatpush.msra.mxu0 %v223
        %247 = vmatpush.msra.mxu0 %v222
        %248 = vmatpush.msra.mxu0 %v221
        %249 = vmatpush.msra.mxu0 %v220
        %250 = vmatpush.msra.mxu0 %v219
        %251 = vmatmul.f32.gmra.mxu0 %v217
        %v252 = vpop.f32.mrf.mxu0
        %v253 = vadd.f32 0.0, %v252
        %254 = vmatmul.f32.gmra.mxu0 %v218
        %v255 = vpop.f32.mrf.mxu0
        %v256 = vadd.f32 0.0, %v255
        %257 = vdwg.mxu0
        %vm258 = vcmask 523264
        %259 = vst.msk [vmem:[%s195] sm:$0xff] %vm258, %v253
        %260 = vst.msk [vmem:[%s195 + $0x8] sm:$0xff] %vm258, %v256
        %v261 = vsel %vm258, %v253, 0.0
        %v262 = vsel %vm258, %v256, 0.0
        %v263 = vadd.f32 %v261, %v262
        %v264 = vrot.slane %v263, 4
        %v265 = vadd.f32 %v263, %v264
        %v266 = vrot.slane %v265, 2
        %v267 = vadd.f32 %v265, %v266
        %v268 = vrot.slane %v267, 1
        %v269 = vadd.f32 %v267, %v268
        %v270 = vmul.f32 %v253, %v253
        %v271 = vmul.f32 %v256, %v256
        %v272 = vsel %vm258, %v270, 0.0
        %v273 = vsel %vm258, %v271, 0.0
        %v274 = vadd.f32 %v272, %v273
        %v275 = vrot.slane %v274, 4
        %v276 = vadd.f32 %v274, %v275
        %v277 = vrot.slane %v276, 2
        %v278 = vadd.f32 %v276, %v277
        %v279 = vrot.slane %v278, 1
        %v280 = vadd.f32 %v278, %v279
        %281 = vst.msk [vmem:[%s202] sm:$0xff] %vm258, %v269
        %282 = vst.msk [vmem:[%s209] sm:$0xff] %vm258, %v280
        %s283 = sand.u32 %s77, 1
        %s284 = scalar_lea.sflag [#allocation3], %s283
        %s285 = sand.u32 %s77, 1
        %s286 = smul.addr %s285, 16
        %s287 = scalar_lea.vmem [#allocation2], %s286
        %s288 = sand.u32 %s22, 1
        %s289 = scalar_lea.sflag [#allocation5], %s288
        %s290 = sand.u32 %s103, 1
        %s291 = smul.addr %s290, 8
        %s292 = scalar_lea.vmem [#allocation4], %s291
        %s293 = sand.u32 %s22, 1
        %s294 = scalar_lea.sflag [#allocation5], %s293
        %s295 = sand.u32 %s129, 1
        %s296 = smul.addr %s295, 8
        %s297 = scalar_lea.vmem [#allocation6], %s296
        // Predicated region
        $region29: #{tpu_custom_call.1} parent=27 // pred_check
          %p298 = pneg %p87
        $region30: #{tpu_custom_call.1} parent=27 // pred_check_branch
          %300 = sbr.rel (%p298) target = $region32
        $region31: #{tpu_custom_call.1} parent=27 // pred_region
          %s301 = smul.u32 2, %s22
          %303 = vsyncadd %s284, 0
          %s304 = smul.addr %s301, 8
          %s305 = scalar_lea.hbm %s2, %s304
          %s306 = sshll.u32 %s287, 4
          %s307 = int_to_ptr.vmem [resolvable:$true] %s306
          %s308 = sshll.u32 %s305, 4
          %s309 = int_to_ptr.hbm [resolvable:$true] %s308
          %314 = dma.vmem_to_hbm [thread:$0]  %s307, 256, %s309, %s284, 128, 128, 8
        $region32: #{tpu_custom_call.1} parent=27 // pred_fallthru
          _
        // Predicated region
        $region33: #{tpu_custom_call.1} parent=27 // pred_check
          %p315 = pneg %p113
        $region34: #{tpu_custom_call.1} parent=27 // pred_check_branch
          %317 = sbr.rel (%p315) target = $region36
        $region35: #{tpu_custom_call.1} parent=27 // pred_region
          %319 = vsyncadd %s289, 0
          %s320 = smul.addr %s22, 8
          %s321 = scalar_lea.hbm %s3, %s320
          %s323 = sshll.u32 %s292, 4
          %s324 = int_to_ptr.vmem [resolvable:$true] %s323
          %s325 = sshll.u32 %s321, 4
          %s326 = int_to_ptr.hbm [resolvable:$true] %s325
          %328 = dma.vmem_to_hbm [thread:$0]  %s324, 128, %s326, %s289
        $region36: #{tpu_custom_call.1} parent=27 // pred_fallthru
          _
        // Predicated region
        $region37: #{tpu_custom_call.1} parent=27 // pred_check
          %p329 = pneg %p139
        $region38: #{tpu_custom_call.1} parent=27 // pred_check_branch
          %331 = sbr.rel (%p329) target = $region40
        $region39: #{tpu_custom_call.1} parent=27 // pred_region
          %333 = vsyncadd %s294, 0
          %s334 = smul.addr %s22, 8
          %s335 = scalar_lea.hbm %s4, %s334
          %s337 = sshll.u32 %s297, 4
          %s338 = int_to_ptr.vmem [resolvable:$true] %s337
          %s339 = sshll.u32 %s335, 4
          %s340 = int_to_ptr.hbm [resolvable:$true] %s339
          %342 = dma.vmem_to_hbm [thread:$0]  %s338, 128, %s340, %s294
        $region40: #{tpu_custom_call.1} parent=27 // pred_fallthru
          _
      $region28: #{tpu_custom_call.1} parent=5 // pred_fallthru
        _
      %p343 = scmp.le.s32.totalorder 2, %s17
      // Predicated region
      $region41: #{tpu_custom_call.1} parent=5 // pred_check
        %p344 = pneg %p343
      $region42: #{tpu_custom_call.1} parent=5 // pred_check_branch
        %346 = sbr.rel (%p344) target = $region44
      $region43: #{tpu_custom_call.1} parent=5 // pred_region
        %s347 = ssub.s32 %s17, 2
        // Predicated region
        $region45: #{tpu_custom_call.1} parent=43 // pred_check
          %p348 = pneg %p93
        $region46: #{tpu_custom_call.1} parent=43 // pred_check_branch
          %350 = sbr.rel (%p348) target = $region48
        $region47: #{tpu_custom_call.1} parent=43 // pred_region
          %s351 = sand.u32 %s78, 1
          %s352 = scalar_lea.sflag [#allocation3], %s351
          %s353 = sand.u32 %s78, 1
          %s354 = smul.addr %s353, 16
          %s355 = scalar_lea.vmem [#allocation2], %s354
          %357 = dma.done %s352, 256
        $region48: #{tpu_custom_call.1} parent=43 // pred_fallthru
          _
        // Predicated region
        $region49: #{tpu_custom_call.1} parent=43 // pred_check
          %p358 = pneg %p119
        $region50: #{tpu_custom_call.1} parent=43 // pred_check_branch
          %360 = sbr.rel (%p358) target = $region52
        $region51: #{tpu_custom_call.1} parent=43 // pred_region
          %s361 = sand.u32 %s23, 1
          %s362 = scalar_lea.sflag [#allocation5], %s361
          %s363 = sand.u32 %s104, 1
          %s364 = smul.addr %s363, 8
          %s365 = scalar_lea.vmem [#allocation4], %s364
          %367 = dma.done %s362, 128
        $region52: #{tpu_custom_call.1} parent=43 // pred_fallthru
          _
        // Predicated region
        $region53: #{tpu_custom_call.1} parent=43 // pred_check
          %p368 = pneg %p145
        $region54: #{tpu_custom_call.1} parent=43 // pred_check_branch
          %370 = sbr.rel (%p368) target = $region56
        $region55: #{tpu_custom_call.1} parent=43 // pred_region
          %s371 = sand.u32 %s23, 1
          %s372 = scalar_lea.sflag [#allocation5], %s371
          %s373 = sand.u32 %s130, 1
          %s374 = smul.addr %s373, 8
          %s375 = scalar_lea.vmem [#allocation6], %s374
          %377 = dma.done %s372, 128
        $region56: #{tpu_custom_call.1} parent=43 // pred_fallthru
          _
      $region44: #{tpu_custom_call.1} parent=5 // pred_fallthru
        _
    $region6: #{tpu_custom_call.1} parent=1 // loop_footer
      %s21 = sadd.s32 1, %s17
    $region7: #{tpu_custom_call.1} parent=1 // loop_footer_branch
      %16 = sbr.rel target = $region3
    $region8: #{tpu_custom_call.1} parent=1 // loop_exit
      _
    %378 = vsyncpa [#allocation3], 1
    %s379 = scalar_lea.sflag [#allocation3], 1
    %380 = vsyncpa %s379, 1
    %381 = vsyncpa [#allocation5], 1
    %s382 = scalar_lea.sflag [#allocation5], 1
    %383 = vsyncpa %s382, 1

</llo_original>
